<compile_context>
chip_gen: v7x
topology: tpu7x:2x2x1
jax: 0.10.0
libtpu: 0.0.40
codegen_flags: <defaults>
</compile_context>

<pallas_src>
import functools

import jax
import jax.numpy as jnp
from jax.experimental import pallas as pl
from jax.experimental.pallas import tpu as pltpu


def _node_attn_kernel(s1_ref, s2_ref, adj_ref, e_ref, *, use_mask):
    """One (tm, tn) output tile.

    s1_ref : (tm, 1)  row scores   (X @ W @ a1) for this tile's rows
    s2_ref : (1, tn)  col scores   (X @ W @ a2) for this tile's cols (lane-dense)
    adj_ref: (tm, tn) adjacency tile
    e_ref  : (tm, tn) output tile
    """
    # Outer-sum broadcast: (tm,1) + (1,tn) -> (tm,tn), pure VPU, no XLU traffic.
    e = s1_ref[...].astype(jnp.float32) + s2_ref[...].astype(jnp.float32)
    # LeakyReLU(0.2)
    e = jnp.where(e > 0, e, 0.2 * e)

    adj = adj_ref[...].astype(jnp.float32)
    if use_mask:
        e = jnp.where(adj > 0, e, jnp.zeros_like(e))

    # e = e * (A + 1)
    e_ref[...] = (e * (adj + 1.0)).astype(e_ref.dtype)


def node_attn_map(X, A, W, a, *, use_mask=False, tm=256, tn=512,
                  out_dtype=jnp.float32):
    """Pallas implementation of NodeAttnMap.forward(X, A).

    The projections are computed once with XLA; the Pallas kernel streams A and
    writes e. A may be passed in a narrower dtype (e.g. bf16) to cut HBM traffic;
    arithmetic is always carried out in f32.
    """
    N, F = X.shape
    H = W.shape[1]
    assert A.shape == (N, N)
    assert a.shape == (2 * H, 1)

    # Clamp tiles to the problem size; keep lane dim a multiple of 128.
    tm = min(tm, N)
    tn = min(tn, N)
    assert N % tm == 0 and N % tn == 0, "N must be divisible by tile sizes"

    # ---- Hoisted projections: O(N*F*H), done exactly once. ----
    Wh = jnp.dot(X.astype(jnp.float32), W.astype(jnp.float32),
                 preferred_element_type=jnp.float32)            # (N, H)
    s1 = jnp.dot(Wh, a[:H, :].astype(jnp.float32),
                 preferred_element_type=jnp.float32)            # (N, 1)
    s2 = jnp.dot(Wh, a[H:, :].astype(jnp.float32),
                 preferred_element_type=jnp.float32).reshape(1, N)  # (1, N), lane-dense

    grid = (N // tm, N // tn)
    kernel = functools.partial(_node_attn_kernel, use_mask=use_mask)

    # VMEM budget: double-buffered A tile + e tile (f32) plus tiny score slabs
    # and compiler scratch headroom.  Kept well under v7x's 64 MiB.
    tile_bytes = tm * tn * 4
    vmem_limit = 2 * 2 * tile_bytes + 2 * 2 * (tm + tn) * 4 + (4 << 20)
    vmem_limit = int(min(max(vmem_limit, 16 << 20), 48 << 20))

    elem_bytes = jnp.dtype(A.dtype).itemsize + jnp.dtype(out_dtype).itemsize
    cost = pl.CostEstimate(
        flops=5 * N * N,                    # add, cmp/select, mul, add1, mul
        transcendentals=0,
        bytes_accessed=elem_bytes * N * N + 8 * N,
    )

    return pl.pallas_call(
        kernel,
        out_shape=jax.ShapeDtypeStruct((N, N), out_dtype),
        grid_spec=pltpu.PrefetchScalarGridSpec(
            num_scalar_prefetch=0,
            grid=grid,
            in_specs=[
                pl.BlockSpec((tm, 1), lambda i, j: (i, 0)),    # row scores
                pl.BlockSpec((1, tn), lambda i, j: (0, j)),    # col scores (lane-dense)
                pl.BlockSpec((tm, tn), lambda i, j: (i, j)),   # A tile
            ],
            out_specs=pl.BlockSpec((tm, tn), lambda i, j: (i, j)),
        ),
        compiler_params=pltpu.CompilerParams(
            dimension_semantics=("parallel", "parallel"),
            vmem_limit_bytes=vmem_limit,
        ),
        cost_estimate=cost,
    )(s1, s2, A)


def _xavier_uniform(key, shape, gain):
    fan_in, fan_out = shape[0], shape[1]
    bound = gain * jnp.sqrt(6.0 / (fan_in + fan_out))
    return jax.random.uniform(key, shape, jnp.float32, minval=-bound, maxval=bound)


def _reference(X, A, W, a, use_mask=False):
    """Pure-JAX reference matching the PyTorch forward."""
    H = W.shape[1]
    Wh = X @ W
    Wh1 = Wh @ a[:H, :]
    Wh2 = Wh @ a[H:, :]
    e = Wh1 + Wh2.T
    e = jnp.where(e > 0, e, 0.2 * e)       # LeakyReLU(0.2)
    if use_mask:
        e = jnp.where(A > 0, e, jnp.zeros_like(e))
    return e * (A + 1.0)


if __name__ == "__main__":
    # Small, deterministic example: N nodes, in_features, nhid.
    N, IN_FEATURES, NHID = 256, 32, 32

    key = jax.random.PRNGKey(0)
    k_x, k_a_adj, k_w, k_a = jax.random.split(key, 4)

    X = jax.random.normal(k_x, (N, IN_FEATURES), jnp.float32)
    # Sparse-ish non-negative adjacency.
    A = (jax.random.uniform(k_a_adj, (N, N), jnp.float32) > 0.7).astype(jnp.float32)

    # Parameters, xavier_uniform with gain=1.414 as in the module __init__.
    W = _xavier_uniform(k_w, (IN_FEATURES, NHID), 1.414)
    a = _xavier_uniform(k_a, (2 * NHID, 1), 1.414)

    ok = True
    for use_mask in (False, True):
        out = node_attn_map(X, A, W, a, use_mask=use_mask)
        out = jax.block_until_ready(out)
        ref = _reference(X, A, W, a, use_mask=use_mask)
        ok &= out.shape == (N, N)
        ok &= bool(jnp.allclose(out, ref, atol=1e-4, rtol=1e-4))

    assert ok, "mismatch vs reference"
    print("KERNEL_OK")
</pallas_src>

<mosaic_0001>
module attributes {stable_mosaic.version = 11 : i64} {
  func.func @_node_attn_kernel(%arg0: i32, %arg1: i32, %arg2: memref<256x1xf32, #tpu.memory_space<vmem>>, %arg3: memref<1x256xf32, #tpu.memory_space<vmem>>, %arg4: memref<256x256xf32, #tpu.memory_space<vmem>>, %arg5: memref<256x256xf32, #tpu.memory_space<vmem>>) attributes {dimension_semantics = [#tpu.dimension_semantics<parallel>, #tpu.dimension_semantics<parallel>], iteration_bounds = array<i64: 1, 1>, scalar_prefetch = 0 : i64, scratch_operands = 0 : i64, tpu.core_type = #tpu.core_type<tc>, window_params = [{transform_indices = @transform_0, window_bounds = array<i64: 256, 1>}, {transform_indices = @transform_1, window_bounds = array<i64: 1, 256>}, {transform_indices = @transform_2, window_bounds = array<i64: 256, 256>}, {transform_indices = @transform_3, window_bounds = array<i64: 256, 256>}]} {
    %c0 = arith.constant 0 : index
    %c0_0 = arith.constant 0 : index
    %0 = vector.load %arg2[%c0, %c0_0] : memref<256x1xf32, #tpu.memory_space<vmem>>, vector<256x1xf32>
    %c0_1 = arith.constant 0 : index
    %c0_2 = arith.constant 0 : index
    %1 = vector.load %arg3[%c0_1, %c0_2] : memref<1x256xf32, #tpu.memory_space<vmem>>, vector<1x256xf32>
    %2 = vector.broadcast %0 : vector<256x1xf32> to vector<256x256xf32>
    %3 = vector.broadcast %1 : vector<1x256xf32> to vector<256x256xf32>
    %4 = arith.addf %2, %3 : vector<256x256xf32>
    %cst = arith.constant 0.000000e+00 : f32
    %5 = vector.broadcast %cst : f32 to vector<256x256xf32>
    %6 = arith.cmpf ogt, %4, %5 : vector<256x256xf32>
    %cst_3 = arith.constant 2.000000e-01 : f32
    %7 = vector.broadcast %cst_3 : f32 to vector<256x256xf32>
    %8 = arith.mulf %7, %4 : vector<256x256xf32>
    %9 = arith.select %6, %4, %8 : vector<256x256xi1>, vector<256x256xf32>
    %c0_4 = arith.constant 0 : index
    %c0_5 = arith.constant 0 : index
    %10 = vector.load %arg4[%c0_4, %c0_5] : memref<256x256xf32, #tpu.memory_space<vmem>>, vector<256x256xf32>
    %cst_6 = arith.constant 1.000000e+00 : f32
    %11 = vector.broadcast %cst_6 : f32 to vector<256x256xf32>
    %12 = arith.addf %10, %11 : vector<256x256xf32>
    %13 = arith.mulf %9, %12 : vector<256x256xf32>
    %c0_7 = arith.constant 0 : index
    %c0_8 = arith.constant 0 : index
    %14 = vector.load %arg5[%c0_7, %c0_8] : memref<256x256xf32, #tpu.memory_space<vmem>>, vector<256x256xf32>
    tpu.vector_store %arg5[%c0_7, %c0_8], %13 {strides = array<i32>} : memref<256x256xf32, #tpu.memory_space<vmem>>, vector<256x256xf32>,
    return
  }
  func.func @transform_0(%arg0: i32, %arg1: i32) -> (i32, i32) {
    %c0_i32 = arith.constant 0 : i32
    %c0_i32_0 = arith.constant 0 : i32
    return %arg0, %c0_i32 : i32, i32
  }
  func.func @transform_1(%arg0: i32, %arg1: i32) -> (i32, i32) {
    %c0_i32 = arith.constant 0 : i32
    %c0_i32_0 = arith.constant 0 : i32
    return %c0_i32, %arg1 : i32, i32
  }
  func.func @transform_2(%arg0: i32, %arg1: i32) -> (i32, i32) {
    %c0_i32 = arith.constant 0 : i32
    return %arg0, %arg1 : i32, i32
  }
  func.func @transform_3(%arg0: i32, %arg1: i32) -> (i32, i32) {
    %c0_i32 = arith.constant 0 : i32
    return %arg0, %arg1 : i32, i32
  }
}

</mosaic_0001>

<llo_original>
// kernel: tpu_custom_call.1
$region0: #{tpu_custom_call.1}
  #allocation0 [shape = 'u32[]', space=smem, size = 0x4, offset = 0x4, fixed_abs, tag = 'smem constant byte address 0x4 - core index']
  #allocation1 [shape = 'u32[144,128]{1,0:T(1,128)}', space=vmem, size = 0x12000, scoped, tag = 'internal scratch']
  %s0 = inlined_call_operand.vmem [shape: f32[256,1], index: 0, kind: input, shape index: {}]
  %s1 = inlined_call_operand.vmem [shape: f32[1,256], index: 1, kind: input, shape index: {}]
  %s2 = inlined_call_operand.hbm [shape: f32[256,256], index: 2, kind: input, shape index: {}]
  %s3 = inlined_call_operand.hbm [shape: f32[256,256], index: 3, kind: output, shape index: {}]
  %s4 = sld [smem:[#allocation0]]
  $region26: #{tpu_custom_call.1} parent=0
    _
  %s6 = ssub.s32 1, %s4
  %s7 = scalar_select 0, %s6, %s4
  $region1: #{tpu_custom_call.1} parent=0
    #allocation2 [shape = 'u8[262144]{0}', space=vmem, size = 0x40000, scoped, tag = 'input window, operand 2, single buffered']
    #allocation3 [shape = 's32[1]{0}', space=sflag, size = 0x4, scoped, tag = 'scoped memory for tpu_custom_call.1']
    #allocation4 [shape = 's32[1]{0}', space=sflag, size = 0x4, scoped, tag = 'scoped memory for tpu_custom_call.1']
    #allocation5 [shape = 'u8[262144]{0}', space=vmem, size = 0x40000, scoped, tag = 'output window, operand 0, single buffered']
    %8 = vsyncpa [#allocation3], 0
    %9 = vsyncpa [#allocation4], 0
    // Predicated region
    $region2: #{tpu_custom_call.1} parent=1 // pred_check
      _
    $region3: #{tpu_custom_call.1} parent=1 // pred_check_branch
      %11 = sbr.rel (0) target = $region5
    $region4: #{tpu_custom_call.1} parent=1 // pred_region
      _
    $region5: #{tpu_custom_call.1} parent=1 // pred_fallthru
      _
    // Predicated region
    $region6: #{tpu_custom_call.1} parent=1 // pred_check
      _
    $region7: #{tpu_custom_call.1} parent=1 // pred_check_branch
      %13 = sbr.rel (0) target = $region9
    $region8: #{tpu_custom_call.1} parent=1 // pred_region
      _
    $region9: #{tpu_custom_call.1} parent=1 // pred_fallthru
      _
    // Predicated region
    $region10: #{tpu_custom_call.1} parent=1 // pred_check
      _
    $region11: #{tpu_custom_call.1} parent=1 // pred_check_branch
      %15 = sbr.rel (0) target = $region13
    $region12: #{tpu_custom_call.1} parent=1 // pred_region
      %s17 = ssub.s32 8192, 8192
      %18 = vsyncadd [#allocation3], %s17
      %s19 = sshll.u32 [#allocation2], 4
      %s20 = int_to_ptr.vmem [resolvable:$true] %s19
      %25 = dma.hbm_to_vmem [thread:$0]  %s2, 8192, %s20, [#allocation3], 256, 256, 16
    $region13: #{tpu_custom_call.1} parent=1 // pred_fallthru
      _
    // Predicated region
    $region14: #{tpu_custom_call.1} parent=1 // pred_check
      _
    $region15: #{tpu_custom_call.1} parent=1 // pred_check_branch
      %27 = sbr.rel (0) target = $region17
    $region16: #{tpu_custom_call.1} parent=1 // pred_region
      %28 = dma.done [#allocation3], 8192
    $region17: #{tpu_custom_call.1} parent=1 // pred_fallthru
      _
    %v29 = vld [vmem:[%s0] sm:$0xff]
    %v30 = vld [vmem:[%s0 + $0x8] sm:$0xff]
    %v31 = vld [vmem:[%s0 + $0x10] sm:$0xff]
    %v32 = vld [vmem:[%s0 + $0x18] sm:$0xff]
    %v33 = vld [vmem:[%s0 + $0x20] sm:$0xff]
    %v34 = vld [vmem:[%s0 + $0x28] sm:$0xff]
    %v35 = vld [vmem:[%s0 + $0x30] sm:$0xff]
    %v36 = vld [vmem:[%s0 + $0x38] sm:$0xff]
    %v37 = vld [vmem:[%s0 + $0x40] sm:$0xff]
    %v38 = vld [vmem:[%s0 + $0x48] sm:$0xff]
    %v39 = vld [vmem:[%s0 + $0x50] sm:$0xff]
    %v40 = vld [vmem:[%s0 + $0x58] sm:$0xff]
    %v41 = vld [vmem:[%s0 + $0x60] sm:$0xff]
    %v42 = vld [vmem:[%s0 + $0x68] sm:$0xff]
    %v43 = vld [vmem:[%s0 + $0x70] sm:$0xff]
    %v44 = vld [vmem:[%s0 + $0x78] sm:$0xff]
    %v45 = vld [vmem:[%s0 + $0x80] sm:$0xff]
    %v46 = vld [vmem:[%s0 + $0x88] sm:$0xff]
    %v47 = vld [vmem:[%s0 + $0x90] sm:$0xff]
    %v48 = vld [vmem:[%s0 + $0x98] sm:$0xff]
    %v49 = vld [vmem:[%s0 + $0xa0] sm:$0xff]
    %v50 = vld [vmem:[%s0 + $0xa8] sm:$0xff]
    %v51 = vld [vmem:[%s0 + $0xb0] sm:$0xff]
    %v52 = vld [vmem:[%s0 + $0xb8] sm:$0xff]
    %v53 = vld [vmem:[%s0 + $0xc0] sm:$0xff]
    %v54 = vld [vmem:[%s0 + $0xc8] sm:$0xff]
    %v55 = vld [vmem:[%s0 + $0xd0] sm:$0xff]
    %v56 = vld [vmem:[%s0 + $0xd8] sm:$0xff]
    %v57 = vld [vmem:[%s0 + $0xe0] sm:$0xff]
    %v58 = vld [vmem:[%s0 + $0xe8] sm:$0xff]
    %v59 = vld [vmem:[%s0 + $0xf0] sm:$0xff]
    %v60 = vld [vmem:[%s0 + $0xf8] sm:$0xff]
    %v61 = vld [vmem:[%s1] sm:$0x3]
    %63 = vset.pattern.permute.xlu0 0
    %64 = vperm.xlu0 %63, %v29
    %v65 = vpop.permute.xlu0 %64
    %68 = vset.pattern.permute.xlu0 0
    %69 = vperm.xlu0 %68, %v30
    %v70 = vpop.permute.xlu0 %69
    %73 = vset.pattern.permute.xlu0 0
    %74 = vperm.xlu0 %73, %v31
    %v75 = vpop.permute.xlu0 %74
    %78 = vset.pattern.permute.xlu0 0
    %79 = vperm.xlu0 %78, %v32
    %v80 = vpop.permute.xlu0 %79
    %83 = vset.pattern.permute.xlu0 0
    %84 = vperm.xlu0 %83, %v33
    %v85 = vpop.permute.xlu0 %84
    %88 = vset.pattern.permute.xlu0 0
    %89 = vperm.xlu0 %88, %v34
    %v90 = vpop.permute.xlu0 %89
    %93 = vset.pattern.permute.xlu0 0
    %94 = vperm.xlu0 %93, %v35
    %v95 = vpop.permute.xlu0 %94
    %98 = vset.pattern.permute.xlu0 0
    %99 = vperm.xlu0 %98, %v36
    %v100 = vpop.permute.xlu0 %99
    %103 = vset.pattern.permute.xlu0 0
    %104 = vperm.xlu0 %103, %v37
    %v105 = vpop.permute.xlu0 %104
    %108 = vset.pattern.permute.xlu0 0
    %109 = vperm.xlu0 %108, %v38
    %v110 = vpop.permute.xlu0 %109
    %113 = vset.pattern.permute.xlu0 0
    %114 = vperm.xlu0 %113, %v39
    %v115 = vpop.permute.xlu0 %114
    %118 = vset.pattern.permute.xlu0 0
    %119 = vperm.xlu0 %118, %v40
    %v120 = vpop.permute.xlu0 %119
    %123 = vset.pattern.permute.xlu0 0
    %124 = vperm.xlu0 %123, %v41
    %v125 = vpop.permute.xlu0 %124
    %128 = vset.pattern.permute.xlu0 0
    %129 = vperm.xlu0 %128, %v42
    %v130 = vpop.permute.xlu0 %129
    %133 = vset.pattern.permute.xlu0 0
    %134 = vperm.xlu0 %133, %v43
    %v135 = vpop.permute.xlu0 %134
    %138 = vset.pattern.permute.xlu0 0
    %139 = vperm.xlu0 %138, %v44
    %v140 = vpop.permute.xlu0 %139
    %143 = vset.pattern.permute.xlu0 0
    %144 = vperm.xlu0 %143, %v45
    %v145 = vpop.permute.xlu0 %144
    %148 = vset.pattern.permute.xlu0 0
    %149 = vperm.xlu0 %148, %v46
    %v150 = vpop.permute.xlu0 %149
    %153 = vset.pattern.permute.xlu0 0
    %154 = vperm.xlu0 %153, %v47
    %v155 = vpop.permute.xlu0 %154
    %158 = vset.pattern.permute.xlu0 0
    %159 = vperm.xlu0 %158, %v48
    %v160 = vpop.permute.xlu0 %159
    %163 = vset.pattern.permute.xlu0 0
    %164 = vperm.xlu0 %163, %v49
    %v165 = vpop.permute.xlu0 %164
    %168 = vset.pattern.permute.xlu0 0
    %169 = vperm.xlu0 %168, %v50
    %v170 = vpop.permute.xlu0 %169
    %173 = vset.pattern.permute.xlu0 0
    %174 = vperm.xlu0 %173, %v51
    %v175 = vpop.permute.xlu0 %174
    %178 = vset.pattern.permute.xlu0 0
    %179 = vperm.xlu0 %178, %v52
    %v180 = vpop.permute.xlu0 %179
    %183 = vset.pattern.permute.xlu0 0
    %184 = vperm.xlu0 %183, %v53
    %v185 = vpop.permute.xlu0 %184
    %188 = vset.pattern.permute.xlu0 0
    %189 = vperm.xlu0 %188, %v54
    %v190 = vpop.permute.xlu0 %189
    %193 = vset.pattern.permute.xlu0 0
    %194 = vperm.xlu0 %193, %v55
    %v195 = vpop.permute.xlu0 %194
    %198 = vset.pattern.permute.xlu0 0
    %199 = vperm.xlu0 %198, %v56
    %v200 = vpop.permute.xlu0 %199
    %203 = vset.pattern.permute.xlu0 0
    %204 = vperm.xlu0 %203, %v57
    %v205 = vpop.permute.xlu0 %204
    %208 = vset.pattern.permute.xlu0 0
    %209 = vperm.xlu0 %208, %v58
    %v210 = vpop.permute.xlu0 %209
    %213 = vset.pattern.permute.xlu0 0
    %214 = vperm.xlu0 %213, %v59
    %v215 = vpop.permute.xlu0 %214
    %218 = vset.pattern.permute.xlu0 0
    %219 = vperm.xlu0 %218, %v60
    %v220 = vpop.permute.xlu0 %219
    %v223 = vlaneseq
    %v224 = vshrl.u32 %v223, 7
    %v225 = vsub.s32 0, %v224
    %v226 = vrot.slane %v61, %v225
    %v227 = vlaneseq
    %v228 = vshrl.u32 %v227, 7
    %v229 = vsub.s32 1, %v228
    %v230 = vrot.slane %v61, %v229
    %v233 = vadd.f32 %v65, %v226
    %v234 = vadd.f32 %v65, %v230
    %v235 = vadd.f32 %v70, %v226
    %v236 = vadd.f32 %v70, %v230
    %v237 = vadd.f32 %v75, %v226
    %v238 = vadd.f32 %v75, %v230
    %v239 = vadd.f32 %v80, %v226
    %v240 = vadd.f32 %v80, %v230
    %v241 = vadd.f32 %v85, %v226
    %v242 = vadd.f32 %v85, %v230
    %v243 = vadd.f32 %v90, %v226
    %v244 = vadd.f32 %v90, %v230
    %v245 = vadd.f32 %v95, %v226
    %v246 = vadd.f32 %v95, %v230
    %v247 = vadd.f32 %v100, %v226
    %v248 = vadd.f32 %v100, %v230
    %v249 = vadd.f32 %v105, %v226
    %v250 = vadd.f32 %v105, %v230
    %v251 = vadd.f32 %v110, %v226
    %v252 = vadd.f32 %v110, %v230
    %v253 = vadd.f32 %v115, %v226
    %v254 = vadd.f32 %v115, %v230
    %v255 = vadd.f32 %v120, %v226
    %v256 = vadd.f32 %v120, %v230
    %v257 = vadd.f32 %v125, %v226
    %v258 = vadd.f32 %v125, %v230
    %v259 = vadd.f32 %v130, %v226
    %v260 = vadd.f32 %v130, %v230
    %v261 = vadd.f32 %v135, %v226
    %v262 = vadd.f32 %v135, %v230
    %v263 = vadd.f32 %v140, %v226
    %v264 = vadd.f32 %v140, %v230
    %v265 = vadd.f32 %v145, %v226
    %v266 = vadd.f32 %v145, %v230
    %v267 = vadd.f32 %v150, %v226
    %v268 = vadd.f32 %v150, %v230
    %v269 = vadd.f32 %v155, %v226
    %v270 = vadd.f32 %v155, %v230
    %v271 = vadd.f32 %v160, %v226
    %v272 = vadd.f32 %v160, %v230
    %v273 = vadd.f32 %v165, %v226
    %v274 = vadd.f32 %v165, %v230
    %v275 = vadd.f32 %v170, %v226
    %v276 = vadd.f32 %v170, %v230
    %v277 = vadd.f32 %v175, %v226
    %v278 = vadd.f32 %v175, %v230
    %v279 = vadd.f32 %v180, %v226
    %v280 = vadd.f32 %v180, %v230
    %v281 = vadd.f32 %v185, %v226
    %v282 = vadd.f32 %v185, %v230
    %v283 = vadd.f32 %v190, %v226
    %v284 = vadd.f32 %v190, %v230
    %v285 = vadd.f32 %v195, %v226
    %v286 = vadd.f32 %v195, %v230
    %v287 = vadd.f32 %v200, %v226
    %v288 = vadd.f32 %v200, %v230
    %v289 = vadd.f32 %v205, %v226
    %v290 = vadd.f32 %v205, %v230
    %v291 = vadd.f32 %v210, %v226
    %v292 = vadd.f32 %v210, %v230
    %v293 = vadd.f32 %v215, %v226
    %v294 = vadd.f32 %v215, %v230
    %v295 = vadd.f32 %v220, %v226
    %v296 = vadd.f32 %v220, %v230
    %vm297 = vcmp.gt.f32.partialorder %v233, 0.0
    %vm298 = vcmp.gt.f32.partialorder %v234, 0.0
    %vm299 = vcmp.gt.f32.partialorder %v235, 0.0
    %vm300 = vcmp.gt.f32.partialorder %v236, 0.0
    %vm301 = vcmp.gt.f32.partialorder %v237, 0.0
    %vm302 = vcmp.gt.f32.partialorder %v238, 0.0
    %vm303 = vcmp.gt.f32.partialorder %v239, 0.0
    %vm304 = vcmp.gt.f32.partialorder %v240, 0.0
    %vm305 = vcmp.gt.f32.partialorder %v241, 0.0
    %vm306 = vcmp.gt.f32.partialorder %v242, 0.0
    %vm307 = vcmp.gt.f32.partialorder %v243, 0.0
    %vm308 = vcmp.gt.f32.partialorder %v244, 0.0
    %vm309 = vcmp.gt.f32.partialorder %v245, 0.0
    %vm310 = vcmp.gt.f32.partialorder %v246, 0.0
    %vm311 = vcmp.gt.f32.partialorder %v247, 0.0
    %vm312 = vcmp.gt.f32.partialorder %v248, 0.0
    %vm313 = vcmp.gt.f32.partialorder %v249, 0.0
    %vm314 = vcmp.gt.f32.partialorder %v250, 0.0
    %vm315 = vcmp.gt.f32.partialorder %v251, 0.0
    %vm316 = vcmp.gt.f32.partialorder %v252, 0.0
    %vm317 = vcmp.gt.f32.partialorder %v253, 0.0
    %vm318 = vcmp.gt.f32.partialorder %v254, 0.0
    %vm319 = vcmp.gt.f32.partialorder %v255, 0.0
    %vm320 = vcmp.gt.f32.partialorder %v256, 0.0
    %vm321 = vcmp.gt.f32.partialorder %v257, 0.0
    %vm322 = vcmp.gt.f32.partialorder %v258, 0.0
    %vm323 = vcmp.gt.f32.partialorder %v259, 0.0
    %vm324 = vcmp.gt.f32.partialorder %v260, 0.0
    %vm325 = vcmp.gt.f32.partialorder %v261, 0.0
    %vm326 = vcmp.gt.f32.partialorder %v262, 0.0
    %vm327 = vcmp.gt.f32.partialorder %v263, 0.0
    %vm328 = vcmp.gt.f32.partialorder %v264, 0.0
    %vm329 = vcmp.gt.f32.partialorder %v265, 0.0
    %vm330 = vcmp.gt.f32.partialorder %v266, 0.0
    %vm331 = vcmp.gt.f32.partialorder %v267, 0.0
    %vm332 = vcmp.gt.f32.partialorder %v268, 0.0
    %vm333 = vcmp.gt.f32.partialorder %v269, 0.0
    %vm334 = vcmp.gt.f32.partialorder %v270, 0.0
    %vm335 = vcmp.gt.f32.partialorder %v271, 0.0
    %vm336 = vcmp.gt.f32.partialorder %v272, 0.0
    %vm337 = vcmp.gt.f32.partialorder %v273, 0.0
    %vm338 = vcmp.gt.f32.partialorder %v274, 0.0
    %vm339 = vcmp.gt.f32.partialorder %v275, 0.0
    %vm340 = vcmp.gt.f32.partialorder %v276, 0.0
    %vm341 = vcmp.gt.f32.partialorder %v277, 0.0
    %vm342 = vcmp.gt.f32.partialorder %v278, 0.0
    %vm343 = vcmp.gt.f32.partialorder %v279, 0.0
    %vm344 = vcmp.gt.f32.partialorder %v280, 0.0
    %vm345 = vcmp.gt.f32.partialorder %v281, 0.0
    %vm346 = vcmp.gt.f32.partialorder %v282, 0.0
    %vm347 = vcmp.gt.f32.partialorder %v283, 0.0
    %vm348 = vcmp.gt.f32.partialorder %v284, 0.0
    %vm349 = vcmp.gt.f32.partialorder %v285, 0.0
    %vm350 = vcmp.gt.f32.partialorder %v286, 0.0
    %vm351 = vcmp.gt.f32.partialorder %v287, 0.0
    %vm352 = vcmp.gt.f32.partialorder %v288, 0.0
    %vm353 = vcmp.gt.f32.partialorder %v289, 0.0
    %vm354 = vcmp.gt.f32.partialorder %v290, 0.0
    %vm355 = vcmp.gt.f32.partialorder %v291, 0.0
    %vm356 = vcmp.gt.f32.partialorder %v292, 0.0
    %vm357 = vcmp.gt.f32.partialorder %v293, 0.0
    %vm358 = vcmp.gt.f32.partialorder %v294, 0.0
    %vm359 = vcmp.gt.f32.partialorder %v295, 0.0
    %vm360 = vcmp.gt.f32.partialorder %v296, 0.0
    %v361 = vmul.f32 %v233, 0.2
    %v362 = vmul.f32 %v234, 0.2
    %v363 = vmul.f32 %v235, 0.2
    %v364 = vmul.f32 %v236, 0.2
    %v365 = vmul.f32 %v237, 0.2
    %v366 = vmul.f32 %v238, 0.2
    %v367 = vmul.f32 %v239, 0.2
    %v368 = vmul.f32 %v240, 0.2
    %v369 = vmul.f32 %v241, 0.2
    %v370 = vmul.f32 %v242, 0.2
    %v371 = vmul.f32 %v243, 0.2
    %v372 = vmul.f32 %v244, 0.2
    %v373 = vmul.f32 %v245, 0.2
    %v374 = vmul.f32 %v246, 0.2
    %v375 = vmul.f32 %v247, 0.2
    %v376 = vmul.f32 %v248, 0.2
    %v377 = vmul.f32 %v249, 0.2
    %v378 = vmul.f32 %v250, 0.2
    %v379 = vmul.f32 %v251, 0.2
    %v380 = vmul.f32 %v252, 0.2
    %v381 = vmul.f32 %v253, 0.2
    %v382 = vmul.f32 %v254, 0.2
    %v383 = vmul.f32 %v255, 0.2
    %v384 = vmul.f32 %v256, 0.2
    %v385 = vmul.f32 %v257, 0.2
    %v386 = vmul.f32 %v258, 0.2
    %v387 = vmul.f32 %v259, 0.2
    %v388 = vmul.f32 %v260, 0.2
    %v389 = vmul.f32 %v261, 0.2
    %v390 = vmul.f32 %v262, 0.2
    %v391 = vmul.f32 %v263, 0.2
    %v392 = vmul.f32 %v264, 0.2
    %v393 = vmul.f32 %v265, 0.2
    %v394 = vmul.f32 %v266, 0.2
    %v395 = vmul.f32 %v267, 0.2
    %v396 = vmul.f32 %v268, 0.2
    %v397 = vmul.f32 %v269, 0.2
    %v398 = vmul.f32 %v270, 0.2
    %v399 = vmul.f32 %v271, 0.2
    %v400 = vmul.f32 %v272, 0.2
    %v401 = vmul.f32 %v273, 0.2
    %v402 = vmul.f32 %v274, 0.2
    %v403 = vmul.f32 %v275, 0.2
    %v404 = vmul.f32 %v276, 0.2
    %v405 = vmul.f32 %v277, 0.2
    %v406 = vmul.f32 %v278, 0.2
    %v407 = vmul.f32 %v279, 0.2
    %v408 = vmul.f32 %v280, 0.2
    %v409 = vmul.f32 %v281, 0.2
    %v410 = vmul.f32 %v282, 0.2
    %v411 = vmul.f32 %v283, 0.2
    %v412 = vmul.f32 %v284, 0.2
    %v413 = vmul.f32 %v285, 0.2
    %v414 = vmul.f32 %v286, 0.2
    %v415 = vmul.f32 %v287, 0.2
    %v416 = vmul.f32 %v288, 0.2
    %v417 = vmul.f32 %v289, 0.2
    %v418 = vmul.f32 %v290, 0.2
    %v419 = vmul.f32 %v291, 0.2
    %v420 = vmul.f32 %v292, 0.2
    %v421 = vmul.f32 %v293, 0.2
    %v422 = vmul.f32 %v294, 0.2
    %v423 = vmul.f32 %v295, 0.2
    %v424 = vmul.f32 %v296, 0.2
    %v425 = vsel %vm297, %v233, %v361
    %v426 = vsel %vm298, %v234, %v362
    %v427 = vsel %vm299, %v235, %v363
    %v428 = vsel %vm300, %v236, %v364
    %v429 = vsel %vm301, %v237, %v365
    %v430 = vsel %vm302, %v238, %v366
    %v431 = vsel %vm303, %v239, %v367
    %v432 = vsel %vm304, %v240, %v368
    %v433 = vsel %vm305, %v241, %v369
    %v434 = vsel %vm306, %v242, %v370
    %v435 = vsel %vm307, %v243, %v371
    %v436 = vsel %vm308, %v244, %v372
    %v437 = vsel %vm309, %v245, %v373
    %v438 = vsel %vm310, %v246, %v374
    %v439 = vsel %vm311, %v247, %v375
    %v440 = vsel %vm312, %v248, %v376
    %v441 = vsel %vm313, %v249, %v377
    %v442 = vsel %vm314, %v250, %v378
    %v443 = vsel %vm315, %v251, %v379
    %v444 = vsel %vm316, %v252, %v380
    %v445 = vsel %vm317, %v253, %v381
    %v446 = vsel %vm318, %v254, %v382
    %v447 = vsel %vm319, %v255, %v383
    %v448 = vsel %vm320, %v256, %v384
    %v449 = vsel %vm321, %v257, %v385
    %v450 = vsel %vm322, %v258, %v386
    %v451 = vsel %vm323, %v259, %v387
    %v452 = vsel %vm324, %v260, %v388
    %v453 = vsel %vm325, %v261, %v389
    %v454 = vsel %vm326, %v262, %v390
    %v455 = vsel %vm327, %v263, %v391
    %v456 = vsel %vm328, %v264, %v392
    %v457 = vsel %vm329, %v265, %v393
    %v458 = vsel %vm330, %v266, %v394
    %v459 = vsel %vm331, %v267, %v395
    %v460 = vsel %vm332, %v268, %v396
    %v461 = vsel %vm333, %v269, %v397
    %v462 = vsel %vm334, %v270, %v398
    %v463 = vsel %vm335, %v271, %v399
    %v464 = vsel %vm336, %v272, %v400
    %v465 = vsel %vm337, %v273, %v401
    %v466 = vsel %vm338, %v274, %v402
    %v467 = vsel %vm339, %v275, %v403
    %v468 = vsel %vm340, %v276, %v404
    %v469 = vsel %vm341, %v277, %v405
    %v470 = vsel %vm342, %v278, %v406
    %v471 = vsel %vm343, %v279, %v407
    %v472 = vsel %vm344, %v280, %v408
    %v473 = vsel %vm345, %v281, %v409
    %v474 = vsel %vm346, %v282, %v410
    %v475 = vsel %vm347, %v283, %v411
    %v476 = vsel %vm348, %v284, %v412
    %v477 = vsel %vm349, %v285, %v413
    %v478 = vsel %vm350, %v286, %v414
    %v479 = vsel %vm351, %v287, %v415
    %v480 = vsel %vm352, %v288, %v416
    %v481 = vsel %vm353, %v289, %v417
    %v482 = vsel %vm354, %v290, %v418
    %v483 = vsel %vm355, %v291, %v419
    %v484 = vsel %vm356, %v292, %v420
    %v485 = vsel %vm357, %v293, %v421
    %v486 = vsel %vm358, %v294, %v422
    %v487 = vsel %vm359, %v295, %v423
    %v488 = vsel %vm360, %v296, %v424
    %v489 = vld [vmem:[#allocation2] sm:$0xff]
    %v490 = vld [vmem:[#allocation2 + $0x8] sm:$0xff]
    %v491 = vld [vmem:[#allocation2 + $0x10] sm:$0xff]
    %v492 = vld [vmem:[#allocation2 + $0x18] sm:$0xff]
    %v493 = vld [vmem:[#allocation2 + $0x20] sm:$0xff]
    %v494 = vld [vmem:[#allocation2 + $0x28] sm:$0xff]
    %v495 = vld [vmem:[#allocation2 + $0x30] sm:$0xff]
    %v496 = vld [vmem:[#allocation2 + $0x38] sm:$0xff]
    %v497 = vld [vmem:[#allocation2 + $0x40] sm:$0xff]
    %v498 = vld [vmem:[#allocation2 + $0x48] sm:$0xff]
    %v499 = vld [vmem:[#allocation2 + $0x50] sm:$0xff]
    %v500 = vld [vmem:[#allocation2 + $0x58] sm:$0xff]
    %v501 = vld [vmem:[#allocation2 + $0x60] sm:$0xff]
    %v502 = vld [vmem:[#allocation2 + $0x68] sm:$0xff]
    %v503 = vld [vmem:[#allocation2 + $0x70] sm:$0xff]
    %v504 = vld [vmem:[#allocation2 + $0x78] sm:$0xff]
    %v505 = vld [vmem:[#allocation2 + $0x80] sm:$0xff]
    %v506 = vld [vmem:[#allocation2 + $0x88] sm:$0xff]
    %v507 = vld [vmem:[#allocation2 + $0x90] sm:$0xff]
    %v508 = vld [vmem:[#allocation2 + $0x98] sm:$0xff]
    %v509 = vld [vmem:[#allocation2 + $0xa0] sm:$0xff]
    %v510 = vld [vmem:[#allocation2 + $0xa8] sm:$0xff]
    %v511 = vld [vmem:[#allocation2 + $0xb0] sm:$0xff]
    %v512 = vld [vmem:[#allocation2 + $0xb8] sm:$0xff]
    %v513 = vld [vmem:[#allocation2 + $0xc0] sm:$0xff]
    %v514 = vld [vmem:[#allocation2 + $0xc8] sm:$0xff]
    %v515 = vld [vmem:[#allocation2 + $0xd0] sm:$0xff]
    %v516 = vld [vmem:[#allocation2 + $0xd8] sm:$0xff]
    %v517 = vld [vmem:[#allocation2 + $0xe0] sm:$0xff]
    %v518 = vld [vmem:[#allocation2 + $0xe8] sm:$0xff]
    %v519 = vld [vmem:[#allocation2 + $0xf0] sm:$0xff]
    %v520 = vld [vmem:[#allocation2 + $0xf8] sm:$0xff]
    %v521 = vld [vmem:[#allocation2 + $0x100] sm:$0xff]
    %v522 = vld [vmem:[#allocation2 + $0x108] sm:$0xff]
    %v523 = vld [vmem:[#allocation2 + $0x110] sm:$0xff]
    %v524 = vld [vmem:[#allocation2 + $0x118] sm:$0xff]
    %v525 = vld [vmem:[#allocation2 + $0x120] sm:$0xff]
    %v526 = vld [vmem:[#allocation2 + $0x128] sm:$0xff]
    %v527 = vld [vmem:[#allocation2 + $0x130] sm:$0xff]
    %v528 = vld [vmem:[#allocation2 + $0x138] sm:$0xff]
    %v529 = vld [vmem:[#allocation2 + $0x140] sm:$0xff]
    %v530 = vld [vmem:[#allocation2 + $0x148] sm:$0xff]
    %v531 = vld [vmem:[#allocation2 + $0x150] sm:$0xff]
    %v532 = vld [vmem:[#allocation2 + $0x158] sm:$0xff]
    %v533 = vld [vmem:[#allocation2 + $0x160] sm:$0xff]
    %v534 = vld [vmem:[#allocation2 + $0x168] sm:$0xff]
    %v535 = vld [vmem:[#allocation2 + $0x170] sm:$0xff]
    %v536 = vld [vmem:[#allocation2 + $0x178] sm:$0xff]
    %v537 = vld [vmem:[#allocation2 + $0x180] sm:$0xff]
    %v538 = vld [vmem:[#allocation2 + $0x188] sm:$0xff]
    %v539 = vld [vmem:[#allocation2 + $0x190] sm:$0xff]
    %v540 = vld [vmem:[#allocation2 + $0x198] sm:$0xff]
    %v541 = vld [vmem:[#allocation2 + $0x1a0] sm:$0xff]
    %v542 = vld [vmem:[#allocation2 + $0x1a8] sm:$0xff]
    %v543 = vld [vmem:[#allocation2 + $0x1b0] sm:$0xff]
    %v544 = vld [vmem:[#allocation2 + $0x1b8] sm:$0xff]
    %v545 = vld [vmem:[#allocation2 + $0x1c0] sm:$0xff]
    %v546 = vld [vmem:[#allocation2 + $0x1c8] sm:$0xff]
    %v547 = vld [vmem:[#allocation2 + $0x1d0] sm:$0xff]
    %v548 = vld [vmem:[#allocation2 + $0x1d8] sm:$0xff]
    %v549 = vld [vmem:[#allocation2 + $0x1e0] sm:$0xff]
    %v550 = vld [vmem:[#allocation2 + $0x1e8] sm:$0xff]
    %v551 = vld [vmem:[#allocation2 + $0x1f0] sm:$0xff]
    %v552 = vld [vmem:[#allocation2 + $0x1f8] sm:$0xff]
    %v553 = vadd.f32 %v489, 1.0
    %v554 = vadd.f32 %v490, 1.0
    %v555 = vadd.f32 %v491, 1.0
    %v556 = vadd.f32 %v492, 1.0
    %v557 = vadd.f32 %v493, 1.0
    %v558 = vadd.f32 %v494, 1.0
    %v559 = vadd.f32 %v495, 1.0
    %v560 = vadd.f32 %v496, 1.0
    %v561 = vadd.f32 %v497, 1.0
    %v562 = vadd.f32 %v498, 1.0
    %v563 = vadd.f32 %v499, 1.0
    %v564 = vadd.f32 %v500, 1.0
    %v565 = vadd.f32 %v501, 1.0
    %v566 = vadd.f32 %v502, 1.0
    %v567 = vadd.f32 %v503, 1.0
    %v568 = vadd.f32 %v504, 1.0
    %v569 = vadd.f32 %v505, 1.0
    %v570 = vadd.f32 %v506, 1.0
    %v571 = vadd.f32 %v507, 1.0
    %v572 = vadd.f32 %v508, 1.0
    %v573 = vadd.f32 %v509, 1.0
    %v574 = vadd.f32 %v510, 1.0
    %v575 = vadd.f32 %v511, 1.0
    %v576 = vadd.f32 %v512, 1.0
    %v577 = vadd.f32 %v513, 1.0
    %v578 = vadd.f32 %v514, 1.0
    %v579 = vadd.f32 %v515, 1.0
    %v580 = vadd.f32 %v516, 1.0
    %v581 = vadd.f32 %v517, 1.0
    %v582 = vadd.f32 %v518, 1.0
    %v583 = vadd.f32 %v519, 1.0
    %v584 = vadd.f32 %v520, 1.0
    %v585 = vadd.f32 %v521, 1.0
    %v586 = vadd.f32 %v522, 1.0
    %v587 = vadd.f32 %v523, 1.0
    %v588 = vadd.f32 %v524, 1.0
    %v589 = vadd.f32 %v525, 1.0
    %v590 = vadd.f32 %v526, 1.0
    %v591 = vadd.f32 %v527, 1.0
    %v592 = vadd.f32 %v528, 1.0
    %v593 = vadd.f32 %v529, 1.0
    %v594 = vadd.f32 %v530, 1.0
    %v595 = vadd.f32 %v531, 1.0
    %v596 = vadd.f32 %v532, 1.0
    %v597 = vadd.f32 %v533, 1.0
    %v598 = vadd.f32 %v534, 1.0
    %v599 = vadd.f32 %v535, 1.0
    %v600 = vadd.f32 %v536, 1.0
    %v601 = vadd.f32 %v537, 1.0
    %v602 = vadd.f32 %v538, 1.0
    %v603 = vadd.f32 %v539, 1.0
    %v604 = vadd.f32 %v540, 1.0
    %v605 = vadd.f32 %v541, 1.0
    %v606 = vadd.f32 %v542, 1.0
    %v607 = vadd.f32 %v543, 1.0
    %v608 = vadd.f32 %v544, 1.0
    %v609 = vadd.f32 %v545, 1.0
    %v610 = vadd.f32 %v546, 1.0
    %v611 = vadd.f32 %v547, 1.0
    %v612 = vadd.f32 %v548, 1.0
    %v613 = vadd.f32 %v549, 1.0
    %v614 = vadd.f32 %v550, 1.0
    %v615 = vadd.f32 %v551, 1.0
    %v616 = vadd.f32 %v552, 1.0
    %v617 = vmul.f32 %v425, %v553
    %v618 = vmul.f32 %v426, %v554
    %v619 = vmul.f32 %v427, %v555
    %v620 = vmul.f32 %v428, %v556
    %v621 = vmul.f32 %v429, %v557
    %v622 = vmul.f32 %v430, %v558
    %v623 = vmul.f32 %v431, %v559
    %v624 = vmul.f32 %v432, %v560
    %v625 = vmul.f32 %v433, %v561
    %v626 = vmul.f32 %v434, %v562
    %v627 = vmul.f32 %v435, %v563
    %v628 = vmul.f32 %v436, %v564
    %v629 = vmul.f32 %v437, %v565
    %v630 = vmul.f32 %v438, %v566
    %v631 = vmul.f32 %v439, %v567
    %v632 = vmul.f32 %v440, %v568
    %v633 = vmul.f32 %v441, %v569
    %v634 = vmul.f32 %v442, %v570
    %v635 = vmul.f32 %v443, %v571
    %v636 = vmul.f32 %v444, %v572
    %v637 = vmul.f32 %v445, %v573
    %v638 = vmul.f32 %v446, %v574
    %v639 = vmul.f32 %v447, %v575
    %v640 = vmul.f32 %v448, %v576
    %v641 = vmul.f32 %v449, %v577
    %v642 = vmul.f32 %v450, %v578
    %v643 = vmul.f32 %v451, %v579
    %v644 = vmul.f32 %v452, %v580
    %v645 = vmul.f32 %v453, %v581
    %v646 = vmul.f32 %v454, %v582
    %v647 = vmul.f32 %v455, %v583
    %v648 = vmul.f32 %v456, %v584
    %v649 = vmul.f32 %v457, %v585
    %v650 = vmul.f32 %v458, %v586
    %v651 = vmul.f32 %v459, %v587
    %v652 = vmul.f32 %v460, %v588
    %v653 = vmul.f32 %v461, %v589
    %v654 = vmul.f32 %v462, %v590
    %v655 = vmul.f32 %v463, %v591
    %v656 = vmul.f32 %v464, %v592
    %v657 = vmul.f32 %v465, %v593
    %v658 = vmul.f32 %v466, %v594
    %v659 = vmul.f32 %v467, %v595
    %v660 = vmul.f32 %v468, %v596
    %v661 = vmul.f32 %v469, %v597
    %v662 = vmul.f32 %v470, %v598
    %v663 = vmul.f32 %v471, %v599
    %v664 = vmul.f32 %v472, %v600
    %v665 = vmul.f32 %v473, %v601
    %v666 = vmul.f32 %v474, %v602
    %v667 = vmul.f32 %v475, %v603
    %v668 = vmul.f32 %v476, %v604
    %v669 = vmul.f32 %v477, %v605
    %v670 = vmul.f32 %v478, %v606
    %v671 = vmul.f32 %v479, %v607
    %v672 = vmul.f32 %v480, %v608
    %v673 = vmul.f32 %v481, %v609
    %v674 = vmul.f32 %v482, %v610
    %v675 = vmul.f32 %v483, %v611
    %v676 = vmul.f32 %v484, %v612
    %v677 = vmul.f32 %v485, %v613
    %v678 = vmul.f32 %v486, %v614
    %v679 = vmul.f32 %v487, %v615
    %v680 = vmul.f32 %v488, %v616
    %681 = vst [vmem:[#allocation5] sm:$0xff] %v617
    %682 = vst [vmem:[#allocation5 + $0x8] sm:$0xff] %v618
    %683 = vst [vmem:[#allocation5 + $0x10] sm:$0xff] %v619
    %684 = vst [vmem:[#allocation5 + $0x18] sm:$0xff] %v620
    %685 = vst [vmem:[#allocation5 + $0x20] sm:$0xff] %v621
    %686 = vst [vmem:[#allocation5 + $0x28] sm:$0xff] %v622
    %687 = vst [vmem:[#allocation5 + $0x30] sm:$0xff] %v623
    %688 = vst [vmem:[#allocation5 + $0x38] sm:$0xff] %v624
    %689 = vst [vmem:[#allocation5 + $0x40] sm:$0xff] %v625
    %690 = vst [vmem:[#allocation5 + $0x48] sm:$0xff] %v626
    %691 = vst [vmem:[#allocation5 + $0x50] sm:$0xff] %v627
    %692 = vst [vmem:[#allocation5 + $0x58] sm:$0xff] %v628
    %693 = vst [vmem:[#allocation5 + $0x60] sm:$0xff] %v629
    %694 = vst [vmem:[#allocation5 + $0x68] sm:$0xff] %v630
    %695 = vst [vmem:[#allocation5 + $0x70] sm:$0xff] %v631
    %696 = vst [vmem:[#allocation5 + $0x78] sm:$0xff] %v632
    %697 = vst [vmem:[#allocation5 + $0x80] sm:$0xff] %v633
    %698 = vst [vmem:[#allocation5 + $0x88] sm:$0xff] %v634
    %699 = vst [vmem:[#allocation5 + $0x90] sm:$0xff] %v635
    %700 = vst [vmem:[#allocation5 + $0x98] sm:$0xff] %v636
    %701 = vst [vmem:[#allocation5 + $0xa0] sm:$0xff] %v637
    %702 = vst [vmem:[#allocation5 + $0xa8] sm:$0xff] %v638
    %703 = vst [vmem:[#allocation5 + $0xb0] sm:$0xff] %v639
    %704 = vst [vmem:[#allocation5 + $0xb8] sm:$0xff] %v640
    %705 = vst [vmem:[#allocation5 + $0xc0] sm:$0xff] %v641
    %706 = vst [vmem:[#allocation5 + $0xc8] sm:$0xff] %v642
    %707 = vst [vmem:[#allocation5 + $0xd0] sm:$0xff] %v643
    %708 = vst [vmem:[#allocation5 + $0xd8] sm:$0xff] %v644
    %709 = vst [vmem:[#allocation5 + $0xe0] sm:$0xff] %v645
    %710 = vst [vmem:[#allocation5 + $0xe8] sm:$0xff] %v646
    %711 = vst [vmem:[#allocation5 + $0xf0] sm:$0xff] %v647
    %712 = vst [vmem:[#allocation5 + $0xf8] sm:$0xff] %v648
    %713 = vst [vmem:[#allocation5 + $0x100] sm:$0xff] %v649
    %714 = vst [vmem:[#allocation5 + $0x108] sm:$0xff] %v650
    %715 = vst [vmem:[#allocation5 + $0x110] sm:$0xff] %v651
    %716 = vst [vmem:[#allocation5 + $0x118] sm:$0xff] %v652
    %717 = vst [vmem:[#allocation5 + $0x120] sm:$0xff] %v653
    %718 = vst [vmem:[#allocation5 + $0x128] sm:$0xff] %v654
    %719 = vst [vmem:[#allocation5 + $0x130] sm:$0xff] %v655
    %720 = vst [vmem:[#allocation5 + $0x138] sm:$0xff] %v656
    %721 = vst [vmem:[#allocation5 + $0x140] sm:$0xff] %v657
    %722 = vst [vmem:[#allocation5 + $0x148] sm:$0xff] %v658
    %723 = vst [vmem:[#allocation5 + $0x150] sm:$0xff] %v659
    %724 = vst [vmem:[#allocation5 + $0x158] sm:$0xff] %v660
    %725 = vst [vmem:[#allocation5 + $0x160] sm:$0xff] %v661
    %726 = vst [vmem:[#allocation5 + $0x168] sm:$0xff] %v662
    %727 = vst [vmem:[#allocation5 + $0x170] sm:$0xff] %v663
    %728 = vst [vmem:[#allocation5 + $0x178] sm:$0xff] %v664
    %729 = vst [vmem:[#allocation5 + $0x180] sm:$0xff] %v665
    %730 = vst [vmem:[#allocation5 + $0x188] sm:$0xff] %v666
    %731 = vst [vmem:[#allocation5 + $0x190] sm:$0xff] %v667
    %732 = vst [vmem:[#allocation5 + $0x198] sm:$0xff] %v668
    %733 = vst [vmem:[#allocation5 + $0x1a0] sm:$0xff] %v669
    %734 = vst [vmem:[#allocation5 + $0x1a8] sm:$0xff] %v670
    %735 = vst [vmem:[#allocation5 + $0x1b0] sm:$0xff] %v671
    %736 = vst [vmem:[#allocation5 + $0x1b8] sm:$0xff] %v672
    %737 = vst [vmem:[#allocation5 + $0x1c0] sm:$0xff] %v673
    %738 = vst [vmem:[#allocation5 + $0x1c8] sm:$0xff] %v674
    %739 = vst [vmem:[#allocation5 + $0x1d0] sm:$0xff] %v675
    %740 = vst [vmem:[#allocation5 + $0x1d8] sm:$0xff] %v676
    %741 = vst [vmem:[#allocation5 + $0x1e0] sm:$0xff] %v677
    %742 = vst [vmem:[#allocation5 + $0x1e8] sm:$0xff] %v678
    %743 = vst [vmem:[#allocation5 + $0x1f0] sm:$0xff] %v679
    %744 = vst [vmem:[#allocation5 + $0x1f8] sm:$0xff] %v680
    // Predicated region
    $region18: #{tpu_custom_call.1} parent=1 // pred_check
      _
    $region19: #{tpu_custom_call.1} parent=1 // pred_check_branch
      %746 = sbr.rel (0) target = $region21
    $region20: #{tpu_custom_call.1} parent=1 // pred_region
      %s748 = ssub.s32 8192, 8192
      %749 = vsyncadd [#allocation4], %s748
      %s750 = sshll.u32 [#allocation5], 4
      %s751 = int_to_ptr.vmem [resolvable:$true] %s750
      %756 = dma.vmem_to_hbm [thread:$0]  %s751, 8192, %s3, [#allocation4], 256, 256, 16
    $region21: #{tpu_custom_call.1} parent=1 // pred_fallthru
      _
    // Predicated region
    $region22: #{tpu_custom_call.1} parent=1 // pred_check
      _
    $region23: #{tpu_custom_call.1} parent=1 // pred_check_branch
      %758 = sbr.rel (0) target = $region25
    $region24: #{tpu_custom_call.1} parent=1 // pred_region
      %759 = dma.done [#allocation4], 8192
    $region25: #{tpu_custom_call.1} parent=1 // pred_fallthru
      _
    %760 = vsyncpa [#allocation3], 1
    %761 = vsyncpa [#allocation4], 1

</llo_original>
